<compile_context>
chip_gen: v6e
topology: v6e:2x2x1
jax: 0.10.0
libtpu: 0.0.40
codegen_flags: <defaults>
</compile_context>

<pallas_src>
import functools
import math

import jax
import jax.numpy as jnp
from jax.experimental import pallas as pl
from jax.experimental.pallas import tpu as pltpu


def _vmem_capacity_bytes():
    try:
        return int(pltpu.get_tpu_info().vmem_capacity_bytes)
    except Exception:
        return 64 * 1024 * 1024            # conservative (v7x-sized) fallback


_VMEM_CAP = _vmem_capacity_bytes()
# leave headroom for double-buffered BlockSpec inputs + compiler scratch
VMEM_LIMIT = max(32 * 1024 * 1024, min((_VMEM_CAP * 3) // 4, 100 * 1024 * 1024))

# default tile targets; bigger row tiles on 128 MiB-VMEM parts (v5e/v6e),
# smaller on v7x.  At the demo shapes every dim is smaller so tiles collapse
# to full extents.
TM = 512 if _VMEM_CAP >= 96 * 1024 * 1024 else 256
TN, TK = 256, 512


def _fit(dim, target, align):
    """Largest tile <= target that divides dim and is a multiple of `align`.

    Falls back to the full dimension (always a legal block) when the dim is
    small or no aligned divisor exists -- never silently produces an
    unaligned partial tile."""
    if dim <= target:
        return dim
    t = (target // align) * align
    while t >= align:
        if dim % t == 0:
            return t
        t -= align
    return dim


# --------------------------- tiled matmul kernels ---------------------------

def _matmul_kernel(x_ref, w_ref, b_ref, o_ref, acc_ref, *, activation):
    k = pl.program_id(2)

    @pl.when(k == 0)
    def _():
        acc_ref[...] = jnp.zeros_like(acc_ref)

    acc_ref[...] += jnp.dot(x_ref[...], w_ref[...],
                            preferred_element_type=jnp.float32)

    @pl.when(k == pl.num_programs(2) - 1)
    def _():
        y = acc_ref[...] + b_ref[...]
        if activation == "gelu":
            y = jax.nn.gelu(y, approximate=True)
        o_ref[...] = y.astype(o_ref.dtype)


def linear(x, w, b, activation=None):
    """y = act(x @ w + b); x bf16 [M,K], w bf16 [K,N], b f32 [N] -> bf16 [M,N]."""
    M, K = x.shape
    N = w.shape[1]
    tm, tn, tk = _fit(M, TM, 8), _fit(N, TN, 128), _fit(K, TK, 128)
    grid = (M // tm, N // tn, K // tk)
    return pl.pallas_call(
        functools.partial(_matmul_kernel, activation=activation),
        out_shape=jax.ShapeDtypeStruct((M, N), jnp.bfloat16),
        grid=grid,
        in_specs=[
            pl.BlockSpec((tm, tk), lambda i, j, k: (i, k)),
            pl.BlockSpec((tk, tn), lambda i, j, k: (k, j)),
            pl.BlockSpec((1, tn), lambda i, j, k: (0, j)),
        ],
        out_specs=pl.BlockSpec((tm, tn), lambda i, j, k: (i, j)),
        scratch_shapes=[pltpu.VMEM((tm, tn), jnp.float32)],
        compiler_params=pltpu.CompilerParams(
            dimension_semantics=("parallel", "parallel", "arbitrary"),
            vmem_limit_bytes=VMEM_LIMIT),
    )(x, w, b.reshape(1, N))


def _matmul_add_ln_kernel(x_ref, w_ref, b_ref, r_ref, g_ref, beta_ref,
                          o_ref, acc_ref, *, eps):
    k = pl.program_id(1)

    @pl.when(k == 0)
    def _():
        acc_ref[...] = jnp.zeros_like(acc_ref)

    acc_ref[...] += jnp.dot(x_ref[...], w_ref[...],
                            preferred_element_type=jnp.float32)

    @pl.when(k == pl.num_programs(1) - 1)
    def _():
        h = acc_ref[...] + b_ref[...] + r_ref[...].astype(jnp.float32)
        mu = jnp.mean(h, axis=-1, keepdims=True)
        var = jnp.mean((h - mu) ** 2, axis=-1, keepdims=True)
        inv = jax.lax.rsqrt(var + eps)
        o_ref[...] = ((h - mu) * inv * g_ref[...] + beta_ref[...]).astype(o_ref.dtype)


def linear_add_layernorm(x, w, b, residual, gamma, beta, eps=1e-12):
    """LayerNorm((x @ w + b) + residual); fused matmul + residual + LN -> bf16."""
    M, K = x.shape
    N = w.shape[1]
    tm, tk = _fit(M, TM, 8), _fit(K, TK, 128)
    grid = (M // tm, K // tk)
    return pl.pallas_call(
        functools.partial(_matmul_add_ln_kernel, eps=eps),
        out_shape=jax.ShapeDtypeStruct((M, N), jnp.bfloat16),
        grid=grid,
        in_specs=[
            pl.BlockSpec((tm, tk), lambda i, k: (i, k)),
            pl.BlockSpec((tk, N), lambda i, k: (k, 0)),
            pl.BlockSpec((1, N), lambda i, k: (0, 0)),
            pl.BlockSpec((tm, N), lambda i, k: (i, 0)),
            pl.BlockSpec((1, N), lambda i, k: (0, 0)),
            pl.BlockSpec((1, N), lambda i, k: (0, 0)),
        ],
        out_specs=pl.BlockSpec((tm, N), lambda i, k: (i, 0)),
        scratch_shapes=[pltpu.VMEM((tm, N), jnp.float32)],
        compiler_params=pltpu.CompilerParams(
            dimension_semantics=("parallel", "arbitrary"),
            vmem_limit_bytes=VMEM_LIMIT),
    )(x, w, b.reshape(1, N), residual, gamma.reshape(1, N), beta.reshape(1, N))


def _matmul_softmax_kernel(x_ref, w_ref, b_ref, o_ref, acc_ref):
    k = pl.program_id(1)

    @pl.when(k == 0)
    def _():
        acc_ref[...] = jnp.zeros_like(acc_ref)

    acc_ref[...] += jnp.dot(x_ref[...], w_ref[...],
                            preferred_element_type=jnp.float32)

    @pl.when(k == pl.num_programs(1) - 1)
    def _():
        logits = acc_ref[...] + b_ref[...]
        logits = logits - jnp.max(logits, axis=-1, keepdims=True)
        e = jnp.exp(logits)
        inv = pl.reciprocal(jnp.sum(e, axis=-1, keepdims=True), approx=False)
        o_ref[...] = (e * inv).astype(o_ref.dtype)


def linear_softmax(x, w, b):
    """softmax(x @ w + b, axis=-1) fused: the [M, vocab] logits never hit HBM.

    TODO(synk): at realistic vocab sizes (esp. on v7x, 64 MiB VMEM) this needs
    an online softmax over N tiles; here vocab fits one lane-resident block."""
    M, K = x.shape
    N = w.shape[1]
    tm, tk = _fit(M, TM, 8), _fit(K, TK, 128)
    grid = (M // tm, K // tk)
    return pl.pallas_call(
        _matmul_softmax_kernel,
        out_shape=jax.ShapeDtypeStruct((M, N), jnp.float32),
        grid=grid,
        in_specs=[
            pl.BlockSpec((tm, tk), lambda i, k: (i, k)),
            pl.BlockSpec((tk, N), lambda i, k: (k, 0)),
            pl.BlockSpec((1, N), lambda i, k: (0, 0)),
        ],
        out_specs=pl.BlockSpec((tm, N), lambda i, k: (i, 0)),
        scratch_shapes=[pltpu.VMEM((tm, N), jnp.float32)],
        compiler_params=pltpu.CompilerParams(
            dimension_semantics=("parallel", "arbitrary"),
            vmem_limit_bytes=VMEM_LIMIT),
    )(x, w, b.reshape(1, N))


# ------------------------ fused QKV projection (head-major) ------------------

def _qkv_kernel(x_ref, w_ref, b_ref, o_ref, acc_ref):
    k = pl.program_id(2)

    @pl.when(k == 0)
    def _():
        acc_ref[...] = jnp.zeros_like(acc_ref)

    acc_ref[...] += jnp.dot(x_ref[...], w_ref[0],
                            preferred_element_type=jnp.float32)

    @pl.when(k == pl.num_programs(2) - 1)
    def _():
        o_ref[0] = (acc_ref[...] + b_ref[0]).astype(o_ref.dtype)


def linear_qkv(x, w3, b3):
    """Head-major fused QKV projection: x[M,K] @ w3[p,K,dh] + b3 -> [p, M, dh].

    Plane p = which*heads + head, which in {0:Q, 1:K, 2:V}.  Attention reads
    its per-head (S, dh) blocks straight out of this slab via index_maps."""
    M, K = x.shape
    P, _, dh = w3.shape
    tm, tk = _fit(M, TM, 8), _fit(K, TK, 128)
    grid = (M // tm, P, K // tk)
    return pl.pallas_call(
        _qkv_kernel,
        out_shape=jax.ShapeDtypeStruct((P, M, dh), jnp.bfloat16),
        grid=grid,
        in_specs=[
            pl.BlockSpec((tm, tk), lambda i, j, k: (i, k)),
            pl.BlockSpec((1, tk, dh), lambda i, j, k: (j, k, 0)),
            pl.BlockSpec((1, 1, dh), lambda i, j, k: (j, 0, 0)),
        ],
        out_specs=pl.BlockSpec((1, tm, dh), lambda i, j, k: (j, i, 0)),
        scratch_shapes=[pltpu.VMEM((tm, dh), jnp.float32)],
        compiler_params=pltpu.CompilerParams(
            dimension_semantics=("parallel", "parallel", "arbitrary"),
            vmem_limit_bytes=VMEM_LIMIT),
    )(x, w3, b3)


# ------------------------------ attention ------------------------------------

def _attn_kernel(q_ref, k_ref, v_ref, o_ref):
    # 1/sqrt(dh) is pre-folded into the Q projection weights at init time.
    q = q_ref[0]                                           # (S, dh) bf16
    k = k_ref[0]
    v = v_ref[0]
    # contract on the last axis of both operands -> no materialized transpose
    s = jax.lax.dot_general(q, k, (((1,), (1,)), ((), ())),
                            preferred_element_type=jnp.float32)     # (S, S)
    s = s - jnp.max(s, axis=-1, keepdims=True)
    e = jnp.exp(s)
    p = e * pl.reciprocal(jnp.sum(e, axis=-1, keepdims=True), approx=False)
    ctx = jnp.dot(p.astype(jnp.bfloat16), v, preferred_element_type=jnp.float32)
    o_ref[0] = ctx.astype(o_ref.dtype)
    # TODO(synk): tile the KV axis (flash-style online softmax) for real S.


def attention(qkv, B, S, num_heads):
    """(batch, head)-gridded attention over the head-major QKV slab.

    qkv: [3*heads, B*S, dh] -> context [heads, B*S, dh] (bf16)."""
    _, M, dh = qkv.shape
    return pl.pallas_call(
        _attn_kernel,
        out_shape=jax.ShapeDtypeStruct((num_heads, M, dh), jnp.bfloat16),
        grid=(B, num_heads),
        in_specs=[
            pl.BlockSpec((1, S, dh), lambda b, h: (h, b, 0)),
            pl.BlockSpec((1, S, dh), lambda b, h: (num_heads + h, b, 0)),
            pl.BlockSpec((1, S, dh), lambda b, h: (2 * num_heads + h, b, 0)),
        ],
        out_specs=pl.BlockSpec((1, S, dh), lambda b, h: (h, b, 0)),
        compiler_params=pltpu.CompilerParams(
            dimension_semantics=("parallel", "parallel"),
            vmem_limit_bytes=VMEM_LIMIT),
    )(qkv, qkv, qkv)


# --------------- o-projection + residual + LayerNorm (head-major) ------------

def _oproj_ln_kernel(x_ref, w_ref, b_ref, r_ref, g_ref, beta_ref,
                     o_ref, acc_ref, *, eps):
    k = pl.program_id(1)

    @pl.when(k == 0)
    def _():
        acc_ref[...] = jnp.zeros_like(acc_ref)

    acc_ref[...] += jnp.dot(x_ref[0], w_ref[0],
                            preferred_element_type=jnp.float32)

    @pl.when(k == pl.num_programs(1) - 1)
    def _():
        h = acc_ref[...] + b_ref[...] + r_ref[...].astype(jnp.float32)
        mu = jnp.mean(h, axis=-1, keepdims=True)
        var = jnp.mean((h - mu) ** 2, axis=-1, keepdims=True)
        inv = jax.lax.rsqrt(var + eps)
        o_ref[...] = ((h - mu) * inv * g_ref[...] + beta_ref[...]).astype(o_ref.dtype)


def oproj_add_layernorm(ctx, w3, b, residual, gamma, beta, eps=1e-12):
    """LayerNorm(sum_h ctx[h] @ w3[h] + b + residual).

    Consumes the head-major context directly: the head axis is the reduction
    grid axis, so no head-merge transpose or concatenate is ever needed."""
    P, M, dh = ctx.shape
    H = w3.shape[-1]
    tm = _fit(M, TM, 8)
    grid = (M // tm, P)
    return pl.pallas_call(
        functools.partial(_oproj_ln_kernel, eps=eps),
        out_shape=jax.ShapeDtypeStruct((M, H), jnp.bfloat16),
        grid=grid,
        in_specs=[
            pl.BlockSpec((1, tm, dh), lambda i, k: (k, i, 0)),
            pl.BlockSpec((1, dh, H), lambda i, k: (k, 0, 0)),
            pl.BlockSpec((1, H), lambda i, k: (0, 0)),
            pl.BlockSpec((tm, H), lambda i, k: (i, 0)),
            pl.BlockSpec((1, H), lambda i, k: (0, 0)),
            pl.BlockSpec((1, H), lambda i, k: (0, 0)),
        ],
        out_specs=pl.BlockSpec((tm, H), lambda i, k: (i, 0)),
        scratch_shapes=[pltpu.VMEM((tm, H), jnp.float32)],
        compiler_params=pltpu.CompilerParams(
            dimension_semantics=("parallel", "arbitrary"),
            vmem_limit_bytes=VMEM_LIMIT),
    )(ctx, w3, b.reshape(1, H), residual, gamma.reshape(1, H), beta.reshape(1, H))


# ------------------------------ layernorm -----------------------------------

def _ln_kernel(x_ref, g_ref, b_ref, o_ref, *, eps):
    h = x_ref[...].astype(jnp.float32)
    mu = jnp.mean(h, axis=-1, keepdims=True)
    var = jnp.mean((h - mu) ** 2, axis=-1, keepdims=True)
    inv = jax.lax.rsqrt(var + eps)
    o_ref[...] = ((h - mu) * inv * g_ref[...] + b_ref[...]).astype(o_ref.dtype)


def layernorm(x, gamma, beta, eps=1e-12):
    """Row-tiled LayerNorm; f32 stats, bf16 output."""
    M, H = x.shape
    tm = _fit(M, TM, 8)
    return pl.pallas_call(
        functools.partial(_ln_kernel, eps=eps),
        out_shape=jax.ShapeDtypeStruct((M, H), jnp.bfloat16),
        grid=(M // tm,),
        in_specs=[
            pl.BlockSpec((tm, H), lambda i: (i, 0)),
            pl.BlockSpec((1, H), lambda i: (0, 0)),
            pl.BlockSpec((1, H), lambda i: (0, 0)),
        ],
        out_specs=pl.BlockSpec((tm, H), lambda i: (i, 0)),
        compiler_params=pltpu.CompilerParams(
            dimension_semantics=("parallel",),
            vmem_limit_bytes=VMEM_LIMIT),
    )(x, gamma.reshape(1, H), beta.reshape(1, H))


# ------------------------------ model (glue) ---------------------------------

def init_params(key, *, vocab, hidden, ffn, layers, num_heads, max_pos):
    dh = hidden // num_heads
    scale = 1.0 / math.sqrt(dh)

    def nrm(k, shape):
        return 0.02 * jax.random.normal(k, shape, dtype=jnp.float32)

    keys = iter(jax.random.split(key, 4 + layers * 4))
    params = {
        "word_emb": nrm(next(keys), (vocab, hidden)),
        "pos_emb": nrm(next(keys), (max_pos, hidden)),
        "type_emb": nrm(next(keys), (2, hidden)),
        "emb_ln_g": jnp.ones((hidden,), jnp.float32),
        "emb_ln_b": jnp.zeros((hidden,), jnp.float32),
        "cls_w": nrm(next(keys), (hidden, vocab)).astype(jnp.bfloat16),
        "cls_b": jnp.zeros((vocab,), jnp.float32),
        "layers": [],
    }
    for _ in range(layers):
        # fused QKV weight in head-major planes (p = which*heads + head);
        # 1/sqrt(dh) folded into the Q planes (one-time host-side fold).
        qkv_w = nrm(next(keys), (3 * num_heads, hidden, dh))
        qkv_w = qkv_w.at[:num_heads].multiply(scale)
        p = {
            "qkv_w": qkv_w.astype(jnp.bfloat16),
            "qkv_b": jnp.zeros((3 * num_heads, 1, dh), jnp.float32),
            # o-projection weight stored head-major: (heads, dh, H)
            "o_w": nrm(next(keys), (num_heads, dh, hidden)).astype(jnp.bfloat16),
            "o_b": jnp.zeros((hidden,), jnp.float32),
            "ln1_g": jnp.ones((hidden,), jnp.float32),
            "ln1_b": jnp.zeros((hidden,), jnp.float32),
            "ff1_w": nrm(next(keys), (hidden, ffn)).astype(jnp.bfloat16),
            "ff1_b": jnp.zeros((ffn,), jnp.float32),
            "ff2_w": nrm(next(keys), (ffn, hidden)).astype(jnp.bfloat16),
            "ff2_b": jnp.zeros((hidden,), jnp.float32),
            "ln2_g": jnp.ones((hidden,), jnp.float32),
            "ln2_b": jnp.zeros((hidden,), jnp.float32),
        }
        params["layers"].append(p)
    return params, num_heads


def encoder_layer(h, p, B, S, num_heads):
    qkv = linear_qkv(h, p["qkv_w"], p["qkv_b"])              # [3*heads, B*S, dh]
    ctx = attention(qkv, B, S, num_heads)                    # [heads, B*S, dh]
    h = oproj_add_layernorm(ctx, p["o_w"], p["o_b"],         # o-proj + add + LN
                            h, p["ln1_g"], p["ln1_b"])
    ff = linear(h, p["ff1_w"], p["ff1_b"], activation="gelu")
    h = linear_add_layernorm(ff, p["ff2_w"], p["ff2_b"],     # ff2 + add + LN
                             h, p["ln2_g"], p["ln2_b"])
    return h


def language_model_forward(params, num_heads, x_tokens):
    """Equivalent of LanguageModel.forward(x) with y=None -> softmax probs."""
    B, S = x_tokens.shape
    H = params["word_emb"].shape[1]

    # BERT embeddings (gathers are plain-JAX glue; LN runs in a Pallas kernel)
    we = params["word_emb"][x_tokens]                        # (B, S, H)
    pe = params["pos_emb"][jnp.arange(S)][None, :, :]        # (1, S, H)
    te = params["type_emb"][0][None, None, :]                # (1, 1, H)
    emb = (we + pe + te).reshape(B * S, H)
    h = layernorm(emb, params["emb_ln_g"], params["emb_ln_b"])   # bf16 [B*S, H]

    for p in params["layers"]:
        h = encoder_layer(h, p, B, S, num_heads)             # last_hidden_state

    # classify + softmax fused: logits never round-trip HBM
    probs = linear_softmax(h, params["cls_w"], params["cls_b"])
    return probs.reshape(B, S, -1)


# ---------------------------------- main -------------------------------------

if __name__ == "__main__":
    B, S = 2, 8
    VOCAB, HIDDEN, FFN, LAYERS, HEADS, MAX_POS = 128, 32, 64, 2, 4, 16

    key = jax.random.PRNGKey(0)
    pkey, xkey = jax.random.split(key)
    params, num_heads = init_params(
        pkey, vocab=VOCAB, hidden=HIDDEN, ffn=FFN,
        layers=LAYERS, num_heads=HEADS, max_pos=MAX_POS)

    x = jax.random.randint(xkey, (B, S), 0, VOCAB, dtype=jnp.int32)

    probs = language_model_forward(params, num_heads, x)
    jax.block_until_ready(probs)

    assert probs.shape == (B, S, VOCAB)
    assert bool(jnp.all(jnp.isfinite(probs)))
    # softmax rows sum to 1
    assert bool(jnp.allclose(jnp.sum(probs, axis=-1), 1.0, atol=1e-4))

    print("KERNEL_OK")
</pallas_src>

<mosaic_0001>
module attributes {stable_mosaic.version = 11 : i64} {
  func.func @_ln_kernel(%arg0: i32, %arg1: memref<16x32xf32, #tpu.memory_space<vmem>>, %arg2: memref<1x32xf32, #tpu.memory_space<vmem>>, %arg3: memref<1x32xf32, #tpu.memory_space<vmem>>, %arg4: memref<16x32xbf16, #tpu.memory_space<vmem>>) attributes {dimension_semantics = [#tpu.dimension_semantics<parallel>], iteration_bounds = array<i64: 1>, scalar_prefetch = 0 : i64, scratch_operands = 0 : i64, tpu.core_type = #tpu.core_type<tc>, window_params = [{transform_indices = @transform_0, window_bounds = array<i64: 16, 32>}, {pipeline_mode = #tpu.pipeline_mode<synchronous>, transform_indices = @transform_1, window_bounds = array<i64: 1, 32>}, {pipeline_mode = #tpu.pipeline_mode<synchronous>, transform_indices = @transform_2, window_bounds = array<i64: 1, 32>}, {transform_indices = @transform_3, window_bounds = array<i64: 16, 32>}]} {
    %c0 = arith.constant 0 : index
    %c0_0 = arith.constant 0 : index
    %0 = vector.load %arg1[%c0, %c0_0] : memref<16x32xf32, #tpu.memory_space<vmem>>, vector<16x32xf32>
    %cst = arith.constant dense<0.000000e+00> : vector<16xf32>
    %1 = vector.multi_reduction <add>, %0, %cst [1] : vector<16x32xf32> to vector<16xf32>
    %2 = vector.shape_cast %1 : vector<16xf32> to vector<16x1xf32>
    %cst_1 = arith.constant 3.200000e+01 : f32
    %3 = vector.broadcast %cst_1 : f32 to vector<16x1xf32>
    %4 = arith.divf %2, %3 : vector<16x1xf32>
    %5 = vector.broadcast %4 : vector<16x1xf32> to vector<16x32xf32>
    %6 = arith.subf %0, %5 : vector<16x32xf32>
    %7 = arith.mulf %6, %6 : vector<16x32xf32>
    %cst_2 = arith.constant dense<0.000000e+00> : vector<16xf32>
    %8 = vector.multi_reduction <add>, %7, %cst_2 [1] : vector<16x32xf32> to vector<16xf32>
    %9 = vector.shape_cast %8 : vector<16xf32> to vector<16x1xf32>
    %cst_3 = arith.constant 3.200000e+01 : f32
    %10 = vector.broadcast %cst_3 : f32 to vector<16x1xf32>
    %11 = arith.divf %9, %10 : vector<16x1xf32>
    %cst_4 = arith.constant 9.99999996E-13 : f32
    %12 = vector.broadcast %cst_4 : f32 to vector<16x1xf32>
    %13 = arith.addf %11, %12 : vector<16x1xf32>
    %14 = math.rsqrt %13 : vector<16x1xf32>
    %15 = vector.broadcast %4 : vector<16x1xf32> to vector<16x32xf32>
    %16 = arith.subf %0, %15 : vector<16x32xf32>
    %17 = vector.broadcast %14 : vector<16x1xf32> to vector<16x32xf32>
    %18 = arith.mulf %16, %17 : vector<16x32xf32>
    %c0_5 = arith.constant 0 : index
    %c0_6 = arith.constant 0 : index
    %19 = vector.load %arg2[%c0_5, %c0_6] : memref<1x32xf32, #tpu.memory_space<vmem>>, vector<1x32xf32>
    %20 = vector.broadcast %19 : vector<1x32xf32> to vector<16x32xf32>
    %21 = arith.mulf %18, %20 : vector<16x32xf32>
    %c0_7 = arith.constant 0 : index
    %c0_8 = arith.constant 0 : index
    %22 = vector.load %arg3[%c0_7, %c0_8] : memref<1x32xf32, #tpu.memory_space<vmem>>, vector<1x32xf32>
    %23 = vector.broadcast %22 : vector<1x32xf32> to vector<16x32xf32>
    %24 = arith.addf %21, %23 : vector<16x32xf32>
    %25 = arith.truncf %24 : vector<16x32xf32> to vector<16x32xbf16>
    %c0_9 = arith.constant 0 : index
    %c0_10 = arith.constant 0 : index
    %26 = vector.load %arg4[%c0_9, %c0_10] : memref<16x32xbf16, #tpu.memory_space<vmem>>, vector<16x32xbf16>
    tpu.vector_store %arg4[%c0_9, %c0_10], %25 {strides = array<i32>} : memref<16x32xbf16, #tpu.memory_space<vmem>>, vector<16x32xbf16>,
    return
  }
  func.func @transform_0(%arg0: i32) -> (i32, i32) {
    %c0_i32 = arith.constant 0 : i32
    %c0_i32_0 = arith.constant 0 : i32
    return %arg0, %c0_i32 : i32, i32
  }
  func.func @transform_1(%arg0: i32) -> (i32, i32) {
    %c0_i32 = arith.constant 0 : i32
    %c0_i32_0 = arith.constant 0 : i32
    %c0_i32_1 = arith.constant 0 : i32
    return %c0_i32, %c0_i32_0 : i32, i32
  }
  func.func @transform_2(%arg0: i32) -> (i32, i32) {
    %c0_i32 = arith.constant 0 : i32
    %c0_i32_0 = arith.constant 0 : i32
    %c0_i32_1 = arith.constant 0 : i32
    return %c0_i32, %c0_i32_0 : i32, i32
  }
  func.func @transform_3(%arg0: i32) -> (i32, i32) {
    %c0_i32 = arith.constant 0 : i32
    %c0_i32_0 = arith.constant 0 : i32
    return %arg0, %c0_i32 : i32, i32
  }
}

</mosaic_0001>

<llo_original>
// kernel: tpu_custom_call.1
$region0: #{tpu_custom_call.1}
  #allocation0 [shape = 'u32[]', space=smem, size = 0x4, offset = 0x4, fixed_abs, tag = 'smem constant byte address 0x4 - core index']
  #allocation1 [shape = 'u32[144,128]{1,0:T(1,128)}', space=vmem, size = 0x12000, scoped, tag = 'internal scratch']
  %s0 = inlined_call_operand.hbm [shape: f32[16,32], index: 0, kind: input, shape index: {}]
  %s1 = inlined_call_operand.vmem [shape: f32[1,32], index: 1, kind: input, shape index: {}]
  %s2 = inlined_call_operand.vmem [shape: f32[1,32], index: 2, kind: input, shape index: {}]
  %s3 = inlined_call_operand.hbm [shape: bf16[16,32], index: 3, kind: output, shape index: {}]
  %s4 = sld [smem:[#allocation0]]
  $region26: #{tpu_custom_call.1} parent=0
    _
  %s6 = ssub.s32 1, %s4
  %s7 = scalar_select 0, %s6, %s4
  $region1: #{tpu_custom_call.1} parent=0
    #allocation2 [shape = 'u8[8192]{0}', space=vmem, size = 0x2000, scoped, tag = 'input window, operand 0, single buffered']
    #allocation3 [shape = 's32[1]{0}', space=sflag, size = 0x4, scoped, tag = 'scoped memory for tpu_custom_call.1']
    #allocation4 [shape = 's32[1]{0}', space=sflag, size = 0x4, scoped, tag = 'scoped memory for tpu_custom_call.1']
    #allocation5 [shape = 'u8[4096]{0}', space=vmem, size = 0x1000, scoped, tag = 'output window, operand 0, single buffered']
    %8 = vsyncpa [#allocation3], 0
    %9 = vsyncpa [#allocation4], 0
    // Predicated region
    $region2: #{tpu_custom_call.1} parent=1 // pred_check
      _
    $region3: #{tpu_custom_call.1} parent=1 // pred_check_branch
      %11 = sbr.rel (0) target = $region5
    $region4: #{tpu_custom_call.1} parent=1 // pred_region
      %s13 = ssub.s32 256, 256
      %14 = vsyncadd [#allocation3], %s13
      %s15 = sshll.u32 [#allocation2], 4
      %s16 = int_to_ptr.vmem [resolvable:$true] %s15
      %21 = dma.hbm_to_vmem [thread:$0]  %s0, 256, %s16, [#allocation3], 128, 128, 8
    $region5: #{tpu_custom_call.1} parent=1 // pred_fallthru
      _
    // Predicated region
    $region6: #{tpu_custom_call.1} parent=1 // pred_check
      _
    $region7: #{tpu_custom_call.1} parent=1 // pred_check_branch
      %23 = sbr.rel (0) target = $region9
    $region8: #{tpu_custom_call.1} parent=1 // pred_region
      _
    $region9: #{tpu_custom_call.1} parent=1 // pred_fallthru
      _
    // Predicated region
    $region10: #{tpu_custom_call.1} parent=1 // pred_check
      _
    $region11: #{tpu_custom_call.1} parent=1 // pred_check_branch
      %25 = sbr.rel (0) target = $region13
    $region12: #{tpu_custom_call.1} parent=1 // pred_region
      _
    $region13: #{tpu_custom_call.1} parent=1 // pred_fallthru
      _
    // Predicated region
    $region14: #{tpu_custom_call.1} parent=1 // pred_check
      _
    $region15: #{tpu_custom_call.1} parent=1 // pred_check_branch
      %27 = sbr.rel (0) target = $region17
    $region16: #{tpu_custom_call.1} parent=1 // pred_region
      %28 = dma.done [#allocation3], 256
    $region17: #{tpu_custom_call.1} parent=1 // pred_fallthru
      _
    %v29 = vld [vmem:[#allocation2] sm:$0xff]
    %v30 = vld [vmem:[#allocation2 + $0x8] sm:$0xff]
    %vm31 = vcmask 261120
    %v32 = vsel %vm31, %v29, 0.0
    %33 = vadd.xlane.f32.xlu0 %v32
    %v34 = vpop.xlane.xlu0 %33
    %v35 = vsel %vm31, %v30, 0.0
    %36 = vadd.xlane.f32.xlu0 %v35
    %v37 = vpop.xlane.xlu0 %36
    %v38 = vrcp.pop 32.0
    %v39 = vmul.f32 %v34, %v38
    %v40 = vmul.f32 %v37, %v38
    %v41 = vsub.f32 %v29, %v39
    %v42 = vsub.f32 %v30, %v40
    %v43 = vmul.f32 %v41, %v41
    %v44 = vmul.f32 %v42, %v42
    %v45 = vsel %vm31, %v43, 0.0
    %46 = vadd.xlane.f32.xlu0 %v45
    %v47 = vpop.xlane.xlu0 %46
    %v48 = vsel %vm31, %v44, 0.0
    %49 = vadd.xlane.f32.xlu0 %v48
    %v50 = vpop.xlane.xlu0 %49
    %v51 = vmul.f32 %v47, %v38
    %v52 = vmul.f32 %v50, %v38
    %v53 = vadd.f32 %v51, 1e-12
    %v54 = vadd.f32 %v52, 1e-12
    %v55 = vrsqrt.pop %v53
    %v56 = vrsqrt.pop %v54
    %v57 = vmul.f32 %v41, %v55
    %v58 = vmul.f32 %v42, %v56
    %v59 = vld [vmem:[%s1] sm:$0x1]
    %v61 = vlaneseq
    %v62 = vshrl.u32 %v61, 7
    %v63 = vsub.s32 0, %v62
    %v64 = vrot.slane %v59, %v63
    %v66 = vmul.f32 %v57, %v64
    %v67 = vmul.f32 %v58, %v64
    %v68 = vld [vmem:[%s2] sm:$0x1]
    %v70 = vlaneseq
    %v71 = vshrl.u32 %v70, 7
    %v72 = vsub.s32 0, %v71
    %v73 = vrot.slane %v68, %v72
    %v75 = vadd.f32 %v66, %v73
    %v76 = vadd.f32 %v67, %v73
    %v77 = vpack.c.bf16 %v76, %v75
    %v79 = vunpack.c.l.b16 %v77
    %v80 = vunpack.c.h.b16 %v77
    %v81 = vpack.c.b16 %v79, %v79
    %v82 = vpack.c.b16 %v80, %v80
    %vm85 = vcmask 257024
    %86 = vst.msk [vmem:[#allocation5] sm:$0xf] %vm85, %v81
    %87 = vst.msk [vmem:[#allocation5 + $0x4] sm:$0xf] %vm85, %v82
    // Predicated region
    $region18: #{tpu_custom_call.1} parent=1 // pred_check
      _
    $region19: #{tpu_custom_call.1} parent=1 // pred_check_branch
      %89 = sbr.rel (0) target = $region21
    $region20: #{tpu_custom_call.1} parent=1 // pred_region
      %s91 = ssub.s32 128, 128
      %92 = vsyncadd [#allocation4], %s91
      %s93 = sshll.u32 [#allocation5], 4
      %s94 = int_to_ptr.vmem [resolvable:$true] %s93
      %99 = dma.vmem_to_hbm [thread:$0]  %s94, 128, %s3, [#allocation4], 64, 64, 4
    $region21: #{tpu_custom_call.1} parent=1 // pred_fallthru
      _
    // Predicated region
    $region22: #{tpu_custom_call.1} parent=1 // pred_check
      _
    $region23: #{tpu_custom_call.1} parent=1 // pred_check_branch
      %101 = sbr.rel (0) target = $region25
    $region24: #{tpu_custom_call.1} parent=1 // pred_region
      %102 = dma.done [#allocation4], 128
    $region25: #{tpu_custom_call.1} parent=1 // pred_fallthru
      _
    %103 = vsyncpa [#allocation3], 1
    %104 = vsyncpa [#allocation4], 1

</llo_original>
